<compile_context>
chip_gen: v5e
topology: v5e:2x2
jax: 0.10.0
libtpu: 0.0.40
codegen_flags: <defaults>
</compile_context>

<pallas_src>
import math
import functools

import jax
import jax.numpy as jnp
from jax.experimental import pallas as pl
from jax.experimental.pallas import tpu as pltpu

_LANE = 128          # vreg lane width
_SUBLANE = 8         # f32 sublane count
_MAX_TILE_N = 512    # v6e sweet spot; VMEM budget below shrinks it if needed
_TILE_VMEM_BUDGET = 20 * 1024 * 1024   # conservative across v5e / v6e / v7x
_VMEM_LIMIT_CAP = 64 * 1024 * 1024     # v7x physical VMEM per TensorCore


def _round_up(x, m):
    return ((x + m - 1) // m) * m


def _cdiv(a, b):
    return -(-a // b)


def _halve_tile(t):
    return max(_SUBLANE, _round_up(t // 2, _SUBLANE))


# ---------------------------------------------------------------------------
# Kernels
# ---------------------------------------------------------------------------

def _feat_kernel(x_ref, w1_ref, b1_ref, feat_ref):
    """feat = relu(x @ W1 + b1) for one batch tile (W1 fully VMEM-resident)."""
    x = x_ref[...].astype(w1_ref.dtype)
    z = jnp.dot(x, w1_ref[...], preferred_element_type=jnp.float32)
    feat_ref[...] = jnp.maximum(z + b1_ref[...], 0.0).astype(feat_ref.dtype)


def _feat_logits_kernel(x_ref, w1_ref, b1_ref, w2_ref, b2_ref,
                        feat_ref, logits_ref):
    """feat = relu(x @ W1 + b1); logits = feat @ W2 + b2 (one batch tile)."""
    x = x_ref[...].astype(w1_ref.dtype)
    z = jnp.dot(x, w1_ref[...], preferred_element_type=jnp.float32)
    z = jnp.maximum(z + b1_ref[...], 0.0)
    feat_ref[...] = z.astype(feat_ref.dtype)
    logits = jnp.dot(z.astype(w2_ref.dtype), w2_ref[...],
                     preferred_element_type=jnp.float32)
    logits_ref[...] = (logits + b2_ref[...]).astype(logits_ref.dtype)


def _feat_kernel_ktiled(x_ref, w1_ref, b1_ref, feat_ref, acc_ref):
    """K-tiled first GEMM with f32 VMEM accumulator; relu+store on last k."""
    k = pl.program_id(1)

    @pl.when(k == 0)
    def _():
        acc_ref[...] = jnp.zeros_like(acc_ref)

    x = x_ref[...].astype(w1_ref.dtype)
    acc_ref[...] += jnp.dot(x, w1_ref[...], preferred_element_type=jnp.float32)

    @pl.when(k == pl.num_programs(1) - 1)
    def _():
        feat_ref[...] = jnp.maximum(acc_ref[...] + b1_ref[...],
                                    0.0).astype(feat_ref.dtype)


def _feat_logits_kernel_ktiled(x_ref, w1_ref, b1_ref, w2_ref, b2_ref,
                               feat_ref, logits_ref, acc_ref):
    """K-tiled first GEMM; second (tiny) GEMM only on the last k step."""
    k = pl.program_id(1)

    @pl.when(k == 0)
    def _():
        acc_ref[...] = jnp.zeros_like(acc_ref)

    x = x_ref[...].astype(w1_ref.dtype)
    acc_ref[...] += jnp.dot(x, w1_ref[...], preferred_element_type=jnp.float32)

    @pl.when(k == pl.num_programs(1) - 1)
    def _():
        z = jnp.maximum(acc_ref[...] + b1_ref[...], 0.0)
        feat_ref[...] = z.astype(feat_ref.dtype)
        logits = jnp.dot(z.astype(w2_ref.dtype), w2_ref[...],
                         preferred_element_type=jnp.float32)
        logits_ref[...] = (logits + b2_ref[...]).astype(logits_ref.dtype)


# ---------------------------------------------------------------------------
# Tiling / VMEM budgeting
# ---------------------------------------------------------------------------

def _vmem_need(tile_n, tile_k, d_in, latent, ncls, w_isz, x_isz, sup, k_tiled):
    """Rough VMEM bytes: default pipelining double-buffers every operand."""
    if k_tiled:
        w1_b = 2 * tile_k * latent * w_isz        # per-k W1 block, 2 bufs
        x_b = 2 * tile_n * tile_k * x_isz
        acc_b = tile_n * latent * 4               # f32 scratch accumulator
    else:
        w1_b = 2 * d_in * latent * w_isz          # resident (2 bufs allocated)
        x_b = 2 * tile_n * d_in * x_isz
        acc_b = 0
    need = w1_b + x_b + acc_b
    need += 2 * latent * 4                        # b1
    need += 2 * tile_n * latent * 4               # feat out tile
    if sup:
        need += 2 * latent * ncls * w_isz         # w2
        need += 2 * ncls * 4                      # b2
        need += 2 * tile_n * ncls * 4             # logits out tile
    return need


def _select_tiles(n, d_in, latent, ncls, w_isz, x_isz, sup,
                  budget=_TILE_VMEM_BUDGET, force_tile_k=None):
    # --- batch tile ---
    tile_n = min(_MAX_TILE_N, _round_up(max(n, 1), _SUBLANE))
    # v7x megacore: make sure the "parallel" batch axis has >= 2 steps when
    # the batch is large enough to split.
    while _cdiv(n, tile_n) < 2 and tile_n > _SUBLANE:
        tile_n = _halve_tile(tile_n)
    # bound padding waste on the last batch tile
    while tile_n > _SUBLANE and (_round_up(n, tile_n) - n) > tile_n // 2:
        tile_n = _halve_tile(tile_n)

    # --- K tiling (only when the W1-resident path blows the budget, or forced)
    tile_k, k_tiled = d_in, False
    if (force_tile_k is not None and force_tile_k < d_in
            and d_in % force_tile_k == 0 and force_tile_k % _LANE == 0):
        tile_k, k_tiled = force_tile_k, True
    elif _vmem_need(tile_n, d_in, d_in, latent, ncls, w_isz, x_isz,
                    sup, False) > budget:
        for cand in (2048, 1024, 512, 256, 128):
            if cand < d_in and d_in % cand == 0:
                tile_k, k_tiled = cand, True
                break

    # --- shrink until the budget holds ---
    while _vmem_need(tile_n, tile_k, d_in, latent, ncls, w_isz, x_isz,
                     sup, k_tiled) > budget:
        half_k = tile_k // 2
        if (k_tiled and half_k >= _LANE and half_k % _LANE == 0
                and d_in % half_k == 0):
            tile_k = half_k
        elif tile_n > _SUBLANE:
            tile_n = _halve_tile(tile_n)
        else:
            break
    return tile_n, tile_k, k_tiled


# ---------------------------------------------------------------------------
# Forward
# ---------------------------------------------------------------------------

@functools.partial(jax.jit,
                   static_argnames=("sup", "detached", "force_tile_k"))
def wrapnet_forward(x, params, sup=False, detached=False, force_tile_k=None):
    """x: [N, C, H, W]. Returns feat or (feat, logits), like WrapNet.forward."""
    w1, b1, w2, b2 = params["w1"], params["b1"], params["w2"], params["b2"]

    if detached:
        # torch.no_grad() around features(): block grads into x and the
        # features params; fc_sup params stay differentiable.
        # TODO(synk): define a custom VJP for the fused kernel if this path
        # ever needs to be differentiated end-to-end.
        x = jax.lax.stop_gradient(x)
        w1 = jax.lax.stop_gradient(w1)
        b1 = jax.lax.stop_gradient(b1)

    n = x.shape[0]
    x_flat = x.reshape(n, -1)                     # matches torch .view(N, -1)
    d_in = x_flat.shape[1]
    latent = w1.shape[1]
    ncls = w2.shape[1]
    if w1.shape[0] != d_in or w2.shape[0] != latent:
        raise ValueError("parameter shapes do not match input / latent dims")

    w_isz = jnp.dtype(w1.dtype).itemsize
    x_isz = jnp.dtype(x_flat.dtype).itemsize

    tile_n, tile_k, k_tiled = _select_tiles(
        n, d_in, latent, ncls, w_isz, x_isz, sup, force_tile_k=force_tile_k)

    # Only the batch is ever padded, and only when it does not divide tile_n.
    n_p = _round_up(n, tile_n)
    if n_p != n:
        x_flat = jnp.pad(x_flat, ((0, n_p - n), (0, 0)))
    grid_n = n_p // tile_n

    need = _vmem_need(tile_n, tile_k, d_in, latent, ncls, w_isz, x_isz,
                      sup, k_tiled)
    vmem_limit = int(min(_VMEM_LIMIT_CAP, max(2 * need, 16 * 1024 * 1024)))

    if k_tiled:
        grid = (grid_n, d_in // tile_k)
        dims = ("parallel", "arbitrary")
        x_spec = pl.BlockSpec((tile_n, tile_k), lambda i, k: (i, k))
        w1_spec = pl.BlockSpec((tile_k, latent), lambda i, k: (k, 0))
        b1_spec = pl.BlockSpec((1, latent), lambda i, k: (0, 0))
        w2_spec = pl.BlockSpec((latent, ncls), lambda i, k: (0, 0))
        b2_spec = pl.BlockSpec((1, ncls), lambda i, k: (0, 0))
        feat_spec = pl.BlockSpec((tile_n, latent), lambda i, k: (i, 0))
        logits_spec = pl.BlockSpec((tile_n, ncls), lambda i, k: (i, 0))
        scratch = [pltpu.VMEM((tile_n, latent), jnp.float32)]
        feat_kern, both_kern = _feat_kernel_ktiled, _feat_logits_kernel_ktiled
    else:
        grid = (grid_n,)
        dims = ("parallel",)
        x_spec = pl.BlockSpec((tile_n, d_in), lambda i: (i, 0))
        w1_spec = pl.BlockSpec((d_in, latent), lambda i: (0, 0))
        b1_spec = pl.BlockSpec((1, latent), lambda i: (0, 0))
        w2_spec = pl.BlockSpec((latent, ncls), lambda i: (0, 0))
        b2_spec = pl.BlockSpec((1, ncls), lambda i: (0, 0))
        feat_spec = pl.BlockSpec((tile_n, latent), lambda i: (i, 0))
        logits_spec = pl.BlockSpec((tile_n, ncls), lambda i: (i, 0))
        scratch = []
        feat_kern, both_kern = _feat_kernel, _feat_logits_kernel

    cparams = pltpu.CompilerParams(dimension_semantics=dims,
                                   vmem_limit_bytes=vmem_limit)

    base_bytes = (n_p * d_in * x_isz + d_in * latent * w_isz
                  + latent * 4 + n_p * latent * 4)

    if sup:
        cost = pl.CostEstimate(
            flops=2 * n_p * (d_in * latent + latent * ncls),
            transcendentals=0,
            bytes_accessed=base_bytes + latent * ncls * w_isz + ncls * 4
                           + n_p * ncls * 4,
        )
        feat_p, logits_p = pl.pallas_call(
            both_kern,
            out_shape=(jax.ShapeDtypeStruct((n_p, latent), jnp.float32),
                       jax.ShapeDtypeStruct((n_p, ncls), jnp.float32)),
            grid=grid,
            in_specs=[x_spec, w1_spec, b1_spec, w2_spec, b2_spec],
            out_specs=(feat_spec, logits_spec),
            scratch_shapes=scratch,
            compiler_params=cparams,
            cost_estimate=cost,
        )(x_flat, w1, b1, w2, b2)
        if n_p != n:
            feat_p, logits_p = feat_p[:n], logits_p[:n]
        return feat_p, logits_p

    # sup=False: feat-only kernel (no second GEMM, no logits writeback).
    cost = pl.CostEstimate(flops=2 * n_p * d_in * latent, transcendentals=0,
                           bytes_accessed=base_bytes)
    feat_p = pl.pallas_call(
        feat_kern,
        out_shape=jax.ShapeDtypeStruct((n_p, latent), jnp.float32),
        grid=grid,
        in_specs=[x_spec, w1_spec, b1_spec],
        out_specs=feat_spec,
        scratch_shapes=scratch,
        compiler_params=cparams,
        cost_estimate=cost,
    )(x_flat, w1, b1)
    if n_p != n:
        feat_p = feat_p[:n]
    return feat_p


# ---------------------------------------------------------------------------
# Params
# ---------------------------------------------------------------------------

def init_params(key, d_in, latent_dim, n_classes=10):
    """Deterministic init mimicking nn.Linear (uniform +/- 1/sqrt(fan_in)),
    stored [in_features, out_features] so the kernel does plain x @ W."""
    k1, k2, k3, k4 = jax.random.split(key, 4)
    lim1 = 1.0 / math.sqrt(d_in)
    lim2 = 1.0 / math.sqrt(latent_dim)
    return {
        "w1": jax.random.uniform(k1, (d_in, latent_dim), jnp.float32, -lim1, lim1),
        "b1": jax.random.uniform(k2, (1, latent_dim), jnp.float32, -lim1, lim1),
        "w2": jax.random.uniform(k3, (latent_dim, n_classes), jnp.float32, -lim2, lim2),
        "b2": jax.random.uniform(k4, (1, n_classes), jnp.float32, -lim2, lim2),
    }


def prepare_params(params, compute_dtype=jnp.float32):
    """One-time packing (do NOT call per forward): cast weights to the MXU
    streaming dtype; biases stay f32 and are added on the f32 accumulator."""
    return {
        "w1": params["w1"].astype(compute_dtype),
        "b1": params["b1"].astype(jnp.float32).reshape(1, -1),
        "w2": params["w2"].astype(compute_dtype),
        "b2": params["b2"].astype(jnp.float32).reshape(1, -1),
    }


# ---------------------------------------------------------------------------
# Smoke test
# ---------------------------------------------------------------------------

if __name__ == "__main__":
    key = jax.random.PRNGKey(0)
    kx, kp = jax.random.split(key)

    N, C, H, W = 2, 4, 16, 16
    latent_dim = 32
    d_in = C * H * W

    x = jax.random.normal(kx, (N, C, H, W), jnp.float32)
    raw = init_params(kp, d_in, latent_dim, n_classes=10)

    # Reference in plain JAX (f32)
    xf = x.reshape(N, -1)
    ref_feat = jnp.maximum(xf @ raw["w1"] + raw["b1"], 0.0)
    ref_logits = ref_feat @ raw["w2"] + raw["b2"]

    # --- f32 path: exact parity with the reference ---
    params32 = prepare_params(raw, compute_dtype=jnp.float32)

    feat = jax.block_until_ready(wrapnet_forward(x, params32, sup=False))
    feat2, logits = wrapnet_forward(x, params32, sup=True, detached=True)
    feat2 = jax.block_until_ready(feat2)
    logits = jax.block_until_ready(logits)

    assert feat.shape == (N, latent_dim)
    assert feat2.shape == (N, latent_dim)
    assert logits.shape == (N, 10)
    assert jnp.allclose(feat, ref_feat, atol=1e-5)
    assert jnp.allclose(feat2, ref_feat, atol=1e-5)
    assert jnp.allclose(logits, ref_logits, atol=1e-5)

    # --- exercise the K-tiled accumulator path (d_in=1024 -> 2 k-steps) ---
    feat3, logits3 = wrapnet_forward(x, params32, sup=True, force_tile_k=512)
    feat3 = jax.block_until_ready(feat3)
    logits3 = jax.block_until_ready(logits3)
    assert jnp.allclose(feat3, ref_feat, atol=1e-5)
    assert jnp.allclose(logits3, ref_logits, atol=1e-5)

    # --- bf16-weight path (halves weight DMA; f32 MXU accumulation) ---
    params_bf16 = prepare_params(raw, compute_dtype=jnp.bfloat16)
    feat_b, logits_b = wrapnet_forward(x, params_bf16, sup=True)
    feat_b = jax.block_until_ready(feat_b)
    logits_b = jax.block_until_ready(logits_b)
    assert jnp.allclose(feat_b, ref_feat, atol=5e-2, rtol=5e-2)
    assert jnp.allclose(logits_b, ref_logits, atol=5e-2, rtol=5e-2)

    print("KERNEL_OK")
</pallas_src>

<mosaic_0001>
module attributes {stable_mosaic.version = 11 : i64} {
  func.func @_feat_kernel(%arg0: i32, %arg1: memref<8x1024xf32, #tpu.memory_space<vmem>>, %arg2: memref<1024x32xf32, #tpu.memory_space<vmem>>, %arg3: memref<1x32xf32, #tpu.memory_space<vmem>>, %arg4: memref<8x32xf32, #tpu.memory_space<vmem>>) attributes {dimension_semantics = [#tpu.dimension_semantics<parallel>], iteration_bounds = array<i64: 1>, scalar_prefetch = 0 : i64, scratch_operands = 0 : i64, tpu.core_type = #tpu.core_type<tc>, window_params = [{transform_indices = @transform_0, window_bounds = array<i64: 8, 1024>}, {pipeline_mode = #tpu.pipeline_mode<synchronous>, transform_indices = @transform_1, window_bounds = array<i64: 1024, 32>}, {pipeline_mode = #tpu.pipeline_mode<synchronous>, transform_indices = @transform_2, window_bounds = array<i64: 1, 32>}, {transform_indices = @transform_3, window_bounds = array<i64: 8, 32>}]} {
    %c0 = arith.constant 0 : index
    %c0_0 = arith.constant 0 : index
    %0 = vector.load %arg1[%c0, %c0_0] : memref<8x1024xf32, #tpu.memory_space<vmem>>, vector<8x1024xf32>
    %c0_1 = arith.constant 0 : index
    %c0_2 = arith.constant 0 : index
    %1 = vector.load %arg2[%c0_1, %c0_2] : memref<1024x32xf32, #tpu.memory_space<vmem>>, vector<1024x32xf32>
    %cst = arith.constant dense<0.000000e+00> : vector<8x32xf32>
    %2 = tpu.matmul %0, %1, %cst {dimension_numbers = #tpu.dot_dimension_numbers<[1], [0], [0], [1], [0, 0, 1, 1], [], []>} : vector<8x1024xf32>, vector<1024x32xf32>, vector<8x32xf32> -> vector<8x32xf32>
    %c0_3 = arith.constant 0 : index
    %c0_4 = arith.constant 0 : index
    %3 = vector.load %arg3[%c0_3, %c0_4] : memref<1x32xf32, #tpu.memory_space<vmem>>, vector<1x32xf32>
    %4 = vector.broadcast %3 : vector<1x32xf32> to vector<8x32xf32>
    %5 = arith.addf %2, %4 : vector<8x32xf32>
    %cst_5 = arith.constant 0.000000e+00 : f32
    %6 = vector.broadcast %cst_5 : f32 to vector<8x32xf32>
    %7 = arith.maximumf %5, %6 : vector<8x32xf32>
    %c0_6 = arith.constant 0 : index
    %c0_7 = arith.constant 0 : index
    %8 = vector.load %arg4[%c0_6, %c0_7] : memref<8x32xf32, #tpu.memory_space<vmem>>, vector<8x32xf32>
    tpu.vector_store %arg4[%c0_6, %c0_7], %7 {strides = array<i32>} : memref<8x32xf32, #tpu.memory_space<vmem>>, vector<8x32xf32>,
    return
  }
  func.func @transform_0(%arg0: i32) -> (i32, i32) {
    %c0_i32 = arith.constant 0 : i32
    %c0_i32_0 = arith.constant 0 : i32
    return %arg0, %c0_i32 : i32, i32
  }
  func.func @transform_1(%arg0: i32) -> (i32, i32) {
    %c0_i32 = arith.constant 0 : i32
    %c0_i32_0 = arith.constant 0 : i32
    %c0_i32_1 = arith.constant 0 : i32
    return %c0_i32, %c0_i32_0 : i32, i32
  }
  func.func @transform_2(%arg0: i32) -> (i32, i32) {
    %c0_i32 = arith.constant 0 : i32
    %c0_i32_0 = arith.constant 0 : i32
    %c0_i32_1 = arith.constant 0 : i32
    return %c0_i32, %c0_i32_0 : i32, i32
  }
  func.func @transform_3(%arg0: i32) -> (i32, i32) {
    %c0_i32 = arith.constant 0 : i32
    %c0_i32_0 = arith.constant 0 : i32
    return %arg0, %c0_i32 : i32, i32
  }
}

</mosaic_0001>

<llo_original>
// kernel: wrapnet_forward.1
$region0: #{wrapnet_forward.1}
  #allocation0 [shape = 'u32[]', space=smem, size = 0x4, offset = 0x4, fixed_abs, tag = 'smem constant byte address 0x4 - core index']
  #allocation1 [shape = 'u32[72,128]{1,0:T(1,128)}', space=vmem, size = 0x9000, scoped, tag = 'internal scratch']
  %s0 = inlined_call_operand.vmem [shape: f32[8,1024], index: 0, kind: input, shape index: {}]
  %s1 = inlined_call_operand.vmem [shape: f32[1024,32], index: 1, kind: input, shape index: {}]
  %s2 = inlined_call_operand.vmem [shape: f32[1,32], index: 2, kind: input, shape index: {}]
  %s3 = inlined_call_operand.vmem [shape: f32[8,32], index: 3, kind: output, shape index: {}]
  %s4 = sld [smem:[#allocation0]]
  $region22: #{wrapnet_forward.1} parent=0
    _
  %s6 = ssub.s32 1, %s4
  %s7 = scalar_select 0, %s6, %s4
  // Predicated region
  $region2: #{wrapnet_forward.1} parent=0 // pred_check
    _
  $region3: #{wrapnet_forward.1} parent=0 // pred_check_branch
    %9 = sbr.rel (0) target = $region5
  $region4: #{wrapnet_forward.1} parent=0 // pred_region
    _
  $region5: #{wrapnet_forward.1} parent=0 // pred_fallthru
    _
  // Predicated region
  $region6: #{wrapnet_forward.1} parent=0 // pred_check
    _
  $region7: #{wrapnet_forward.1} parent=0 // pred_check_branch
    %11 = sbr.rel (0) target = $region9
  $region8: #{wrapnet_forward.1} parent=0 // pred_region
    _
  $region9: #{wrapnet_forward.1} parent=0 // pred_fallthru
    _
  // Predicated region
  $region10: #{wrapnet_forward.1} parent=0 // pred_check
    _
  $region11: #{wrapnet_forward.1} parent=0 // pred_check_branch
    %13 = sbr.rel (0) target = $region13
  $region12: #{wrapnet_forward.1} parent=0 // pred_region
    _
  $region13: #{wrapnet_forward.1} parent=0 // pred_fallthru
    _
  %v14 = vld [vmem:[%s0] sm:$0xff]
  %v15 = vld [vmem:[%s0 + $0x8] sm:$0xff]
  %v16 = vld [vmem:[%s0 + $0x10] sm:$0xff]
  %v17 = vld [vmem:[%s0 + $0x18] sm:$0xff]
  %v18 = vld [vmem:[%s0 + $0x20] sm:$0xff]
  %v19 = vld [vmem:[%s0 + $0x28] sm:$0xff]
  %v20 = vld [vmem:[%s0 + $0x30] sm:$0xff]
  %v21 = vld [vmem:[%s0 + $0x38] sm:$0xff]
  %v22 = vld [vmem:[%s1] sm:$0xff]
  %v23 = vld [vmem:[%s1 + $0x8] sm:$0xff]
  %v24 = vld [vmem:[%s1 + $0x10] sm:$0xff]
  %v25 = vld [vmem:[%s1 + $0x18] sm:$0xff]
  %v26 = vld [vmem:[%s1 + $0x20] sm:$0xff]
  %v27 = vld [vmem:[%s1 + $0x28] sm:$0xff]
  %v28 = vld [vmem:[%s1 + $0x30] sm:$0xff]
  %v29 = vld [vmem:[%s1 + $0x38] sm:$0xff]
  %v30 = vld [vmem:[%s1 + $0x40] sm:$0xff]
  %v31 = vld [vmem:[%s1 + $0x48] sm:$0xff]
  %v32 = vld [vmem:[%s1 + $0x50] sm:$0xff]
  %v33 = vld [vmem:[%s1 + $0x58] sm:$0xff]
  %v34 = vld [vmem:[%s1 + $0x60] sm:$0xff]
  %v35 = vld [vmem:[%s1 + $0x68] sm:$0xff]
  %v36 = vld [vmem:[%s1 + $0x70] sm:$0xff]
  %v37 = vld [vmem:[%s1 + $0x78] sm:$0xff]
  %v38 = vld [vmem:[%s1 + $0x80] sm:$0xff]
  %v39 = vld [vmem:[%s1 + $0x88] sm:$0xff]
  %v40 = vld [vmem:[%s1 + $0x90] sm:$0xff]
  %v41 = vld [vmem:[%s1 + $0x98] sm:$0xff]
  %v42 = vld [vmem:[%s1 + $0xa0] sm:$0xff]
  %v43 = vld [vmem:[%s1 + $0xa8] sm:$0xff]
  %v44 = vld [vmem:[%s1 + $0xb0] sm:$0xff]
  %v45 = vld [vmem:[%s1 + $0xb8] sm:$0xff]
  %v46 = vld [vmem:[%s1 + $0xc0] sm:$0xff]
  %v47 = vld [vmem:[%s1 + $0xc8] sm:$0xff]
  %v48 = vld [vmem:[%s1 + $0xd0] sm:$0xff]
  %v49 = vld [vmem:[%s1 + $0xd8] sm:$0xff]
  %v50 = vld [vmem:[%s1 + $0xe0] sm:$0xff]
  %v51 = vld [vmem:[%s1 + $0xe8] sm:$0xff]
  %v52 = vld [vmem:[%s1 + $0xf0] sm:$0xff]
  %v53 = vld [vmem:[%s1 + $0xf8] sm:$0xff]
  %v54 = vld [vmem:[%s1 + $0x100] sm:$0xff]
  %v55 = vld [vmem:[%s1 + $0x108] sm:$0xff]
  %v56 = vld [vmem:[%s1 + $0x110] sm:$0xff]
  %v57 = vld [vmem:[%s1 + $0x118] sm:$0xff]
  %v58 = vld [vmem:[%s1 + $0x120] sm:$0xff]
  %v59 = vld [vmem:[%s1 + $0x128] sm:$0xff]
  %v60 = vld [vmem:[%s1 + $0x130] sm:$0xff]
  %v61 = vld [vmem:[%s1 + $0x138] sm:$0xff]
  %v62 = vld [vmem:[%s1 + $0x140] sm:$0xff]
  %v63 = vld [vmem:[%s1 + $0x148] sm:$0xff]
  %v64 = vld [vmem:[%s1 + $0x150] sm:$0xff]
  %v65 = vld [vmem:[%s1 + $0x158] sm:$0xff]
  %v66 = vld [vmem:[%s1 + $0x160] sm:$0xff]
  %v67 = vld [vmem:[%s1 + $0x168] sm:$0xff]
  %v68 = vld [vmem:[%s1 + $0x170] sm:$0xff]
  %v69 = vld [vmem:[%s1 + $0x178] sm:$0xff]
  %v70 = vld [vmem:[%s1 + $0x180] sm:$0xff]
  %v71 = vld [vmem:[%s1 + $0x188] sm:$0xff]
  %v72 = vld [vmem:[%s1 + $0x190] sm:$0xff]
  %v73 = vld [vmem:[%s1 + $0x198] sm:$0xff]
  %v74 = vld [vmem:[%s1 + $0x1a0] sm:$0xff]
  %v75 = vld [vmem:[%s1 + $0x1a8] sm:$0xff]
  %v76 = vld [vmem:[%s1 + $0x1b0] sm:$0xff]
  %v77 = vld [vmem:[%s1 + $0x1b8] sm:$0xff]
  %v78 = vld [vmem:[%s1 + $0x1c0] sm:$0xff]
  %v79 = vld [vmem:[%s1 + $0x1c8] sm:$0xff]
  %v80 = vld [vmem:[%s1 + $0x1d0] sm:$0xff]
  %v81 = vld [vmem:[%s1 + $0x1d8] sm:$0xff]
  %v82 = vld [vmem:[%s1 + $0x1e0] sm:$0xff]
  %v83 = vld [vmem:[%s1 + $0x1e8] sm:$0xff]
  %v84 = vld [vmem:[%s1 + $0x1f0] sm:$0xff]
  %v85 = vld [vmem:[%s1 + $0x1f8] sm:$0xff]
  %v86 = vld [vmem:[%s1 + $0x200] sm:$0xff]
  %v87 = vld [vmem:[%s1 + $0x208] sm:$0xff]
  %v88 = vld [vmem:[%s1 + $0x210] sm:$0xff]
  %v89 = vld [vmem:[%s1 + $0x218] sm:$0xff]
  %v90 = vld [vmem:[%s1 + $0x220] sm:$0xff]
  %v91 = vld [vmem:[%s1 + $0x228] sm:$0xff]
  %v92 = vld [vmem:[%s1 + $0x230] sm:$0xff]
  %v93 = vld [vmem:[%s1 + $0x238] sm:$0xff]
  %v94 = vld [vmem:[%s1 + $0x240] sm:$0xff]
  %v95 = vld [vmem:[%s1 + $0x248] sm:$0xff]
  %v96 = vld [vmem:[%s1 + $0x250] sm:$0xff]
  %v97 = vld [vmem:[%s1 + $0x258] sm:$0xff]
  %v98 = vld [vmem:[%s1 + $0x260] sm:$0xff]
  %v99 = vld [vmem:[%s1 + $0x268] sm:$0xff]
  %v100 = vld [vmem:[%s1 + $0x270] sm:$0xff]
  %v101 = vld [vmem:[%s1 + $0x278] sm:$0xff]
  %v102 = vld [vmem:[%s1 + $0x280] sm:$0xff]
  %v103 = vld [vmem:[%s1 + $0x288] sm:$0xff]
  %v104 = vld [vmem:[%s1 + $0x290] sm:$0xff]
  %v105 = vld [vmem:[%s1 + $0x298] sm:$0xff]
  %v106 = vld [vmem:[%s1 + $0x2a0] sm:$0xff]
  %v107 = vld [vmem:[%s1 + $0x2a8] sm:$0xff]
  %v108 = vld [vmem:[%s1 + $0x2b0] sm:$0xff]
  %v109 = vld [vmem:[%s1 + $0x2b8] sm:$0xff]
  %v110 = vld [vmem:[%s1 + $0x2c0] sm:$0xff]
  %v111 = vld [vmem:[%s1 + $0x2c8] sm:$0xff]
  %v112 = vld [vmem:[%s1 + $0x2d0] sm:$0xff]
  %v113 = vld [vmem:[%s1 + $0x2d8] sm:$0xff]
  %v114 = vld [vmem:[%s1 + $0x2e0] sm:$0xff]
  %v115 = vld [vmem:[%s1 + $0x2e8] sm:$0xff]
  %v116 = vld [vmem:[%s1 + $0x2f0] sm:$0xff]
  %v117 = vld [vmem:[%s1 + $0x2f8] sm:$0xff]
  %v118 = vld [vmem:[%s1 + $0x300] sm:$0xff]
  %v119 = vld [vmem:[%s1 + $0x308] sm:$0xff]
  %v120 = vld [vmem:[%s1 + $0x310] sm:$0xff]
  %v121 = vld [vmem:[%s1 + $0x318] sm:$0xff]
  %v122 = vld [vmem:[%s1 + $0x320] sm:$0xff]
  %v123 = vld [vmem:[%s1 + $0x328] sm:$0xff]
  %v124 = vld [vmem:[%s1 + $0x330] sm:$0xff]
  %v125 = vld [vmem:[%s1 + $0x338] sm:$0xff]
  %v126 = vld [vmem:[%s1 + $0x340] sm:$0xff]
  %v127 = vld [vmem:[%s1 + $0x348] sm:$0xff]
  %v128 = vld [vmem:[%s1 + $0x350] sm:$0xff]
  %v129 = vld [vmem:[%s1 + $0x358] sm:$0xff]
  %v130 = vld [vmem:[%s1 + $0x360] sm:$0xff]
  %v131 = vld [vmem:[%s1 + $0x368] sm:$0xff]
  %v132 = vld [vmem:[%s1 + $0x370] sm:$0xff]
  %v133 = vld [vmem:[%s1 + $0x378] sm:$0xff]
  %v134 = vld [vmem:[%s1 + $0x380] sm:$0xff]
  %v135 = vld [vmem:[%s1 + $0x388] sm:$0xff]
  %v136 = vld [vmem:[%s1 + $0x390] sm:$0xff]
  %v137 = vld [vmem:[%s1 + $0x398] sm:$0xff]
  %v138 = vld [vmem:[%s1 + $0x3a0] sm:$0xff]
  %v139 = vld [vmem:[%s1 + $0x3a8] sm:$0xff]
  %v140 = vld [vmem:[%s1 + $0x3b0] sm:$0xff]
  %v141 = vld [vmem:[%s1 + $0x3b8] sm:$0xff]
  %v142 = vld [vmem:[%s1 + $0x3c0] sm:$0xff]
  %v143 = vld [vmem:[%s1 + $0x3c8] sm:$0xff]
  %v144 = vld [vmem:[%s1 + $0x3d0] sm:$0xff]
  %v145 = vld [vmem:[%s1 + $0x3d8] sm:$0xff]
  %v146 = vld [vmem:[%s1 + $0x3e0] sm:$0xff]
  %v147 = vld [vmem:[%s1 + $0x3e8] sm:$0xff]
  %v148 = vld [vmem:[%s1 + $0x3f0] sm:$0xff]
  %v149 = vld [vmem:[%s1 + $0x3f8] sm:$0xff]
  %v150 = vld [vmem:[%s2] sm:$0x1]
  %v152 = vperm.slane %v150, 0
  %154 = vmatpush.msra.mxu0 %v37
  %155 = vmatpush.msra.mxu0 %v36
  %156 = vmatpush.msra.mxu0 %v35
  %157 = vmatpush.msra.mxu0 %v34
  %158 = vmatpush.msra.mxu0 %v33
  %159 = vmatpush.msra.mxu0 %v32
  %160 = vmatpush.msra.mxu0 %v31
  %161 = vmatpush.msra.mxu0 %v30
  %162 = vmatpush.msra.mxu0 %v29
  %163 = vmatpush.msra.mxu0 %v28
  %164 = vmatpush.msra.mxu0 %v27
  %165 = vmatpush.msra.mxu0 %v26
  %166 = vmatpush.msra.mxu0 %v25
  %167 = vmatpush.msra.mxu0 %v24
  %168 = vmatpush.msra.mxu0 %v23
  %169 = vmatpush.msra.mxu0 %v22
  %170 = vmatmul.f32.gmra.mxu0 %v14
  %v171 = vpop.f32.mrf.mxu0
  %v172 = vadd.f32 %v152, %v171
  %173 = vdwg.mxu0
  %174 = vmatpush.msra.mxu0 %v53
  %175 = vmatpush.msra.mxu0 %v52
  %176 = vmatpush.msra.mxu0 %v51
  %177 = vmatpush.msra.mxu0 %v50
  %178 = vmatpush.msra.mxu0 %v49
  %179 = vmatpush.msra.mxu0 %v48
  %180 = vmatpush.msra.mxu0 %v47
  %181 = vmatpush.msra.mxu0 %v46
  %182 = vmatpush.msra.mxu0 %v45
  %183 = vmatpush.msra.mxu0 %v44
  %184 = vmatpush.msra.mxu0 %v43
  %185 = vmatpush.msra.mxu0 %v42
  %186 = vmatpush.msra.mxu0 %v41
  %187 = vmatpush.msra.mxu0 %v40
  %188 = vmatpush.msra.mxu0 %v39
  %189 = vmatpush.msra.mxu0 %v38
  %190 = vmatmul.f32.gmra.mxu0 %v15
  %v191 = vpop.f32.mrf.mxu0
  %v192 = vadd.f32 %v172, %v191
  %193 = vdwg.mxu0
  %194 = vmatpush.msra.mxu0 %v69
  %195 = vmatpush.msra.mxu0 %v68
  %196 = vmatpush.msra.mxu0 %v67
  %197 = vmatpush.msra.mxu0 %v66
  %198 = vmatpush.msra.mxu0 %v65
  %199 = vmatpush.msra.mxu0 %v64
  %200 = vmatpush.msra.mxu0 %v63
  %201 = vmatpush.msra.mxu0 %v62
  %202 = vmatpush.msra.mxu0 %v61
  %203 = vmatpush.msra.mxu0 %v60
  %204 = vmatpush.msra.mxu0 %v59
  %205 = vmatpush.msra.mxu0 %v58
  %206 = vmatpush.msra.mxu0 %v57
  %207 = vmatpush.msra.mxu0 %v56
  %208 = vmatpush.msra.mxu0 %v55
  %209 = vmatpush.msra.mxu0 %v54
  %210 = vmatmul.f32.gmra.mxu0 %v16
  %v211 = vpop.f32.mrf.mxu0
  %v212 = vadd.f32 %v192, %v211
  %213 = vdwg.mxu0
  %214 = vmatpush.msra.mxu0 %v85
  %215 = vmatpush.msra.mxu0 %v84
  %216 = vmatpush.msra.mxu0 %v83
  %217 = vmatpush.msra.mxu0 %v82
  %218 = vmatpush.msra.mxu0 %v81
  %219 = vmatpush.msra.mxu0 %v80
  %220 = vmatpush.msra.mxu0 %v79
  %221 = vmatpush.msra.mxu0 %v78
  %222 = vmatpush.msra.mxu0 %v77
  %223 = vmatpush.msra.mxu0 %v76
  %224 = vmatpush.msra.mxu0 %v75
  %225 = vmatpush.msra.mxu0 %v74
  %226 = vmatpush.msra.mxu0 %v73
  %227 = vmatpush.msra.mxu0 %v72
  %228 = vmatpush.msra.mxu0 %v71
  %229 = vmatpush.msra.mxu0 %v70
  %230 = vmatmul.f32.gmra.mxu0 %v17
  %v231 = vpop.f32.mrf.mxu0
  %v232 = vadd.f32 %v212, %v231
  %233 = vdwg.mxu0
  %234 = vmatpush.msra.mxu0 %v101
  %235 = vmatpush.msra.mxu0 %v100
  %236 = vmatpush.msra.mxu0 %v99
  %237 = vmatpush.msra.mxu0 %v98
  %238 = vmatpush.msra.mxu0 %v97
  %239 = vmatpush.msra.mxu0 %v96
  %240 = vmatpush.msra.mxu0 %v95
  %241 = vmatpush.msra.mxu0 %v94
  %242 = vmatpush.msra.mxu0 %v93
  %243 = vmatpush.msra.mxu0 %v92
  %244 = vmatpush.msra.mxu0 %v91
  %245 = vmatpush.msra.mxu0 %v90
  %246 = vmatpush.msra.mxu0 %v89
  %247 = vmatpush.msra.mxu0 %v88
  %248 = vmatpush.msra.mxu0 %v87
  %249 = vmatpush.msra.mxu0 %v86
  %250 = vmatmul.f32.gmra.mxu0 %v18
  %v251 = vpop.f32.mrf.mxu0
  %v252 = vadd.f32 %v232, %v251
  %253 = vdwg.mxu0
  %254 = vmatpush.msra.mxu0 %v117
  %255 = vmatpush.msra.mxu0 %v116
  %256 = vmatpush.msra.mxu0 %v115
  %257 = vmatpush.msra.mxu0 %v114
  %258 = vmatpush.msra.mxu0 %v113
  %259 = vmatpush.msra.mxu0 %v112
  %260 = vmatpush.msra.mxu0 %v111
  %261 = vmatpush.msra.mxu0 %v110
  %262 = vmatpush.msra.mxu0 %v109
  %263 = vmatpush.msra.mxu0 %v108
  %264 = vmatpush.msra.mxu0 %v107
  %265 = vmatpush.msra.mxu0 %v106
  %266 = vmatpush.msra.mxu0 %v105
  %267 = vmatpush.msra.mxu0 %v104
  %268 = vmatpush.msra.mxu0 %v103
  %269 = vmatpush.msra.mxu0 %v102
  %270 = vmatmul.f32.gmra.mxu0 %v19
  %v271 = vpop.f32.mrf.mxu0
  %v272 = vadd.f32 %v252, %v271
  %273 = vdwg.mxu0
  %274 = vmatpush.msra.mxu0 %v133
  %275 = vmatpush.msra.mxu0 %v132
  %276 = vmatpush.msra.mxu0 %v131
  %277 = vmatpush.msra.mxu0 %v130
  %278 = vmatpush.msra.mxu0 %v129
  %279 = vmatpush.msra.mxu0 %v128
  %280 = vmatpush.msra.mxu0 %v127
  %281 = vmatpush.msra.mxu0 %v126
  %282 = vmatpush.msra.mxu0 %v125
  %283 = vmatpush.msra.mxu0 %v124
  %284 = vmatpush.msra.mxu0 %v123
  %285 = vmatpush.msra.mxu0 %v122
  %286 = vmatpush.msra.mxu0 %v121
  %287 = vmatpush.msra.mxu0 %v120
  %288 = vmatpush.msra.mxu0 %v119
  %289 = vmatpush.msra.mxu0 %v118
  %290 = vmatmul.f32.gmra.mxu0 %v20
  %v291 = vpop.f32.mrf.mxu0
  %v292 = vadd.f32 %v272, %v291
  %293 = vdwg.mxu0
  %294 = vmatpush.msra.mxu0 %v149
  %295 = vmatpush.msra.mxu0 %v148
  %296 = vmatpush.msra.mxu0 %v147
  %297 = vmatpush.msra.mxu0 %v146
  %298 = vmatpush.msra.mxu0 %v145
  %299 = vmatpush.msra.mxu0 %v144
  %300 = vmatpush.msra.mxu0 %v143
  %301 = vmatpush.msra.mxu0 %v142
  %302 = vmatpush.msra.mxu0 %v141
  %303 = vmatpush.msra.mxu0 %v140
  %304 = vmatpush.msra.mxu0 %v139
  %305 = vmatpush.msra.mxu0 %v138
  %306 = vmatpush.msra.mxu0 %v137
  %307 = vmatpush.msra.mxu0 %v136
  %308 = vmatpush.msra.mxu0 %v135
  %309 = vmatpush.msra.mxu0 %v134
  %310 = vmatmul.f32.gmra.mxu0 %v21
  %v311 = vpop.f32.mrf.mxu0
  %v312 = vadd.f32 %v292, %v311
  %313 = vdwg.mxu0
  %v314 = vmax.f32 %v312, 0.0
  %vm315 = vcmask 261120
  %316 = vst.msk [vmem:[%s3] sm:$0xff] %vm315, %v314
  // Predicated region
  $region14: #{wrapnet_forward.1} parent=0 // pred_check
    _
  $region15: #{wrapnet_forward.1} parent=0 // pred_check_branch
    %318 = sbr.rel (0) target = $region17
  $region16: #{wrapnet_forward.1} parent=0 // pred_region
    _
  $region17: #{wrapnet_forward.1} parent=0 // pred_fallthru
    _
  // Predicated region
  $region18: #{wrapnet_forward.1} parent=0 // pred_check
    _
  $region19: #{wrapnet_forward.1} parent=0 // pred_check_branch
    %320 = sbr.rel (0) target = $region21
  $region20: #{wrapnet_forward.1} parent=0 // pred_region
    _
  $region21: #{wrapnet_forward.1} parent=0 // pred_fallthru
    _

</llo_original>
